<compile_context>
chip_gen: v7x
topology: tpu7x:2x2x1
jax: 0.10.0
libtpu: 0.0.40
codegen_flags: <defaults>
</compile_context>

<pallas_src>
import functools

import jax
import jax.numpy as jnp
from jax.experimental import pallas as pl
from jax.experimental.pallas import tpu as pltpu

BN_EPS = 1e-5
LANE = 128          # pad Cout up to a multiple of the lane width -> unmasked vst
DEFAULT_TM = 256    # row-tile size (multiple of 8 sublanes)


def _round_up(x, m):
    return (x + m - 1) // m * m


def _make_pass1_kernel(m_valid, tile_m):
    """Conv tile (single im2col matmul) + per-tile BN partial statistics."""

    def kernel(p_ref, w_ref, conv_ref, mean_ref, m2_ref):
        t = pl.program_id(0)

        # --- convolution: one MXU matmul, contraction dim = KH*KW*Cin ---
        y = jnp.dot(p_ref[...], w_ref[...],
                    preferred_element_type=jnp.float32)          # (TM, CP) fp32
        conv_ref[...] = y

        # --- per-tile batch-norm partial stats (centered form, masked padded rows) ---
        cnt = jnp.minimum(tile_m, m_valid - t * tile_m).astype(jnp.float32)
        row_ids = t * tile_m + jax.lax.broadcasted_iota(jnp.int32, (tile_m, 1), 0)
        valid = (row_ids < m_valid).astype(jnp.float32)           # (TM, 1)

        tile_sum = jnp.sum(y, axis=0, keepdims=True)              # padded rows are exact 0
        tile_mean = tile_sum * (1.0 / cnt)                        # (1, CP)
        d = (y - tile_mean) * valid
        tile_m2 = jnp.sum(d * d, axis=0, keepdims=True)           # (1, CP)

        mean_ref[...] = tile_mean.reshape(1, 1, mean_ref.shape[-1])
        m2_ref[...] = tile_m2.reshape(1, 1, m2_ref.shape[-1])

    return kernel


def _pass2_kernel(conv_ref, scale_ref, shift_ref, out_ref):
    # (conv - mean) * inv_std * gamma + beta  ==  conv * scale + shift ; then ReLU.
    out_ref[...] = jnp.maximum(conv_ref[...] * scale_ref[...] + shift_ref[...], 0.0)


@functools.partial(jax.jit, static_argnames=("padding",))
def base_conv_forward(x_nchw, weight_oihw, bias, gamma, beta, *, padding):
    """x_nchw: (N, Cin, H, W); weight_oihw: (Cout, Cin, KH, KW). Returns NCHW output."""
    del bias  # per-channel constant before training-mode BN: exact no-op for the output

    N, Cin, H, W = x_nchw.shape
    Cout, _, KH, KW = weight_oihw.shape
    Ho = H + 2 * padding - KH + 1
    Wo = W + 2 * padding - KW + 1
    K = KH * KW * Cin
    CP = _round_up(Cout, LANE)
    M = N * Ho * Wo
    TM = min(DEFAULT_TM, _round_up(M, 8))
    M_pad = _round_up(M, TM)
    T = M_pad // TM

    # ---- glue: NCHW -> NHWC, spatial pad, im2col patch matrix (built once by XLA) ----
    # TODO(synk): fold halo handling / patch extraction into the kernel (pl.Element rows or
    # pltpu.roll) to avoid the KH*KW x HBM blow-up of the patch matrix for large inputs.
    x_nhwc = jnp.transpose(x_nchw, (0, 2, 3, 1))
    xp = jnp.pad(x_nhwc, ((0, 0), (padding, padding), (padding, padding), (0, 0)))
    cols = [xp[:, kh:kh + Ho, kw:kw + Wo, :] for kh in range(KH) for kw in range(KW)]
    patches = jnp.concatenate(cols, axis=-1).reshape(M, K)        # (M, KH*KW*Cin), caller dtype
    patches = jnp.pad(patches, ((0, M_pad - M), (0, 0)))

    w2d = jnp.transpose(weight_oihw, (2, 3, 1, 0)).reshape(K, Cout).astype(x_nchw.dtype)
    w2d = jnp.pad(w2d, ((0, 0), (0, CP - Cout)))                  # lane-dense Cout

    # ---- pass 1: tiled conv matmul + per-tile BN partial stats ----
    conv_buf, tile_mean, tile_m2 = pl.pallas_call(
        _make_pass1_kernel(M, TM),
        out_shape=(
            jax.ShapeDtypeStruct((M_pad, CP), jnp.float32),
            jax.ShapeDtypeStruct((T, 1, CP), jnp.float32),
            jax.ShapeDtypeStruct((T, 1, CP), jnp.float32),
        ),
        grid=(T,),
        in_specs=[
            pl.BlockSpec((TM, K), lambda t: (t, 0)),
            pl.BlockSpec((K, CP), lambda t: (0, 0)),
        ],
        out_specs=(
            pl.BlockSpec((TM, CP), lambda t: (t, 0)),
            pl.BlockSpec((1, 1, CP), lambda t: (t, 0, 0)),
            pl.BlockSpec((1, 1, CP), lambda t: (t, 0, 0)),
        ),
        compiler_params=pltpu.CompilerParams(dimension_semantics=("parallel",)),
    )(patches, w2d)

    # ---- tiny global stat combine (Chan parallel-variance merge); biased var like BN ----
    cnts = jnp.clip(M - jnp.arange(T) * TM, 0, TM).astype(jnp.float32)[:, None]   # (T, 1)
    means = tile_mean[:, 0, :]                                                    # (T, CP)
    mean = jnp.sum(means * cnts, axis=0, keepdims=True) / M                       # (1, CP)
    m2 = (jnp.sum(tile_m2[:, 0, :], axis=0, keepdims=True)
          + jnp.sum(cnts * (means - mean) ** 2, axis=0, keepdims=True))
    var = m2 / M
    inv_std = jax.lax.rsqrt(var + BN_EPS)
    gamma_p = jnp.pad(gamma.astype(jnp.float32), (0, CP - Cout)).reshape(1, CP)
    beta_p = jnp.pad(beta.astype(jnp.float32), (0, CP - Cout)).reshape(1, CP)
    scale = gamma_p * inv_std
    shift = beta_p - mean * scale

    # ---- pass 2: normalize + ReLU, in place on the conv buffer (lane-dense stores) ----
    out_f32 = pl.pallas_call(
        _pass2_kernel,
        out_shape=jax.ShapeDtypeStruct((M_pad, CP), jnp.float32),
        grid=(T,),
        in_specs=[
            pl.BlockSpec((TM, CP), lambda t: (t, 0)),
            pl.BlockSpec((1, CP), lambda t: (0, 0)),
            pl.BlockSpec((1, CP), lambda t: (0, 0)),
        ],
        out_specs=pl.BlockSpec((TM, CP), lambda t: (t, 0)),
        input_output_aliases={0: 0},
        compiler_params=pltpu.CompilerParams(dimension_semantics=("parallel",)),
    )(conv_buf, scale, shift)

    out = out_f32[:M, :Cout].reshape(N, Ho, Wo, Cout)
    return jnp.transpose(out, (0, 3, 1, 2)).astype(x_nchw.dtype)


def _reference_forward(x_nchw, weight_oihw, bias, gamma, beta, *, padding):
    """Pure-JAX reference of the PyTorch forward (training-mode BN, biased var)."""
    y = jax.lax.conv_general_dilated(
        x_nchw.astype(jnp.float32), weight_oihw.astype(jnp.float32),
        window_strides=(1, 1), padding=[(padding, padding), (padding, padding)],
        dimension_numbers=("NCHW", "OIHW", "NCHW"))
    y = y + bias.reshape(1, -1, 1, 1)
    mean = jnp.mean(y, axis=(0, 2, 3), keepdims=True)
    var = jnp.mean((y - mean) ** 2, axis=(0, 2, 3), keepdims=True)
    y = (y - mean) / jnp.sqrt(var + BN_EPS)
    y = y * gamma.reshape(1, -1, 1, 1) + beta.reshape(1, -1, 1, 1)
    return jnp.maximum(y, 0.0)


if __name__ == "__main__":
    # Shapes consistent with BaseConv(inplanes=4, outplanes=8, k_size=3, padding=1).
    N, Cin, H, W = 2, 4, 16, 16
    Cout, Ksz, PAD = 8, 3, 1

    key = jax.random.PRNGKey(0)
    kx, kw, kb, kg, kbe = jax.random.split(key, 5)
    x = jax.random.normal(kx, (N, Cin, H, W), dtype=jnp.float32)
    weight = jax.random.normal(kw, (Cout, Cin, Ksz, Ksz), dtype=jnp.float32) * 0.1
    bias = jax.random.normal(kb, (Cout,), dtype=jnp.float32) * 0.1
    gamma = 1.0 + 0.1 * jax.random.normal(kg, (Cout,), dtype=jnp.float32)
    beta = 0.1 * jax.random.normal(kbe, (Cout,), dtype=jnp.float32)

    out = base_conv_forward(x, weight, bias, gamma, beta, padding=PAD)
    out = jax.block_until_ready(out)

    ref = _reference_forward(x, weight, bias, gamma, beta, padding=PAD)
    assert out.shape == (N, Cout, H, W)
    max_err = float(jnp.max(jnp.abs(out - ref)))
    assert jnp.allclose(out, ref, atol=2e-4, rtol=2e-4), max_err

    print("KERNEL_OK")
</pallas_src>

<mosaic_0001>
module attributes {stable_mosaic.version = 11 : i64} {
  func.func @kernel(%arg0: i32, %arg1: memref<256x36xf32, #tpu.memory_space<vmem>>, %arg2: memref<36x128xf32, #tpu.memory_space<vmem>>, %arg3: memref<256x128xf32, #tpu.memory_space<vmem>>, %arg4: memref<1x1x128xf32, #tpu.memory_space<vmem>>, %arg5: memref<1x1x128xf32, #tpu.memory_space<vmem>>) attributes {dimension_semantics = [#tpu.dimension_semantics<parallel>], iteration_bounds = array<i64: 2>, scalar_prefetch = 0 : i64, scratch_operands = 0 : i64, tpu.core_type = #tpu.core_type<tc>, window_params = [{transform_indices = @transform_0, window_bounds = array<i64: 256, 36>}, {pipeline_mode = #tpu.pipeline_mode<synchronous>, transform_indices = @transform_1, window_bounds = array<i64: 36, 128>}, {transform_indices = @transform_2, window_bounds = array<i64: 256, 128>}, {transform_indices = @transform_3, window_bounds = array<i64: 1, 1, 128>}, {transform_indices = @transform_4, window_bounds = array<i64: 1, 1, 128>}]} {
    %c0 = arith.constant 0 : index
    %c0_0 = arith.constant 0 : index
    %0 = vector.load %arg1[%c0, %c0_0] : memref<256x36xf32, #tpu.memory_space<vmem>>, vector<256x36xf32>
    %c0_1 = arith.constant 0 : index
    %c0_2 = arith.constant 0 : index
    %1 = vector.load %arg2[%c0_1, %c0_2] : memref<36x128xf32, #tpu.memory_space<vmem>>, vector<36x128xf32>
    %cst = arith.constant dense<0.000000e+00> : vector<256x128xf32>
    %2 = tpu.matmul %0, %1, %cst {dimension_numbers = #tpu.dot_dimension_numbers<[1], [0], [0], [1], [0, 0, 1, 1], [], []>} : vector<256x36xf32>, vector<36x128xf32>, vector<256x128xf32> -> vector<256x128xf32>
    %c0_3 = arith.constant 0 : index
    %c0_4 = arith.constant 0 : index
    %3 = vector.load %arg3[%c0_3, %c0_4] : memref<256x128xf32, #tpu.memory_space<vmem>>, vector<256x128xf32>
    tpu.vector_store %arg3[%c0_3, %c0_4], %2 {strides = array<i32>} : memref<256x128xf32, #tpu.memory_space<vmem>>, vector<256x128xf32>,
    %c256_i32 = arith.constant 256 : i32
    %4 = arith.muli %arg0, %c256_i32 : i32
    %c512_i32 = arith.constant 512 : i32
    %5 = arith.subi %c512_i32, %4 : i32
    %c256_i32_5 = arith.constant 256 : i32
    %6 = arith.minsi %c256_i32_5, %5 : i32
    %7 = arith.sitofp %6 : i32 to f32
    %c256_i32_6 = arith.constant 256 : i32
    %8 = arith.muli %arg0, %c256_i32_6 : i32
    %9 = tpu.iota {dimensions = array<i32: 0>} : vector<256x1xi32>
    %10 = vector.broadcast %8 : i32 to vector<256x1xi32>
    %11 = arith.addi %10, %9 : vector<256x1xi32>
    %c512_i32_7 = arith.constant 512 : i32
    %12 = vector.broadcast %c512_i32_7 : i32 to vector<256x1xi32>
    %13 = arith.cmpi slt, %11, %12 : vector<256x1xi32>
    %14 = arith.extui %13 : vector<256x1xi1> to vector<256x1xi32>
    %15 = arith.sitofp %14 : vector<256x1xi32> to vector<256x1xf32>
    %cst_8 = arith.constant dense<0.000000e+00> : vector<128xf32>
    %16 = vector.multi_reduction <add>, %2, %cst_8 [0] : vector<256x128xf32> to vector<128xf32>
    %17 = vector.shape_cast %16 : vector<128xf32> to vector<1x128xf32>
    %cst_9 = arith.constant 1.000000e+00 : f32
    %18 = arith.divf %cst_9, %7 : f32
    %19 = vector.broadcast %18 : f32 to vector<1x128xf32>
    %20 = arith.mulf %17, %19 : vector<1x128xf32>
    %21 = vector.broadcast %20 : vector<1x128xf32> to vector<256x128xf32>
    %22 = arith.subf %2, %21 : vector<256x128xf32>
    %23 = vector.broadcast %15 : vector<256x1xf32> to vector<256x128xf32>
    %24 = arith.mulf %22, %23 : vector<256x128xf32>
    %25 = arith.mulf %24, %24 : vector<256x128xf32>
    %cst_10 = arith.constant dense<0.000000e+00> : vector<128xf32>
    %26 = vector.multi_reduction <add>, %25, %cst_10 [0] : vector<256x128xf32> to vector<128xf32>
    %27 = vector.shape_cast %26 : vector<128xf32> to vector<1x128xf32>
    %28 = vector.shape_cast %20 : vector<1x128xf32> to vector<1x1x128xf32>
    %c0_11 = arith.constant 0 : index
    %c0_12 = arith.constant 0 : index
    %c0_13 = arith.constant 0 : index
    %29 = vector.load %arg4[%c0_11, %c0_12, %c0_13] : memref<1x1x128xf32, #tpu.memory_space<vmem>>, vector<1x1x128xf32>
    tpu.vector_store %arg4[%c0_11, %c0_12, %c0_13], %28 {strides = array<i32>} : memref<1x1x128xf32, #tpu.memory_space<vmem>>, vector<1x1x128xf32>,
    %30 = vector.shape_cast %27 : vector<1x128xf32> to vector<1x1x128xf32>
    %c0_14 = arith.constant 0 : index
    %c0_15 = arith.constant 0 : index
    %c0_16 = arith.constant 0 : index
    %31 = vector.load %arg5[%c0_14, %c0_15, %c0_16] : memref<1x1x128xf32, #tpu.memory_space<vmem>>, vector<1x1x128xf32>
    tpu.vector_store %arg5[%c0_14, %c0_15, %c0_16], %30 {strides = array<i32>} : memref<1x1x128xf32, #tpu.memory_space<vmem>>, vector<1x1x128xf32>,
    return
  }
  func.func @transform_0(%arg0: i32) -> (i32, i32) {
    %c0_i32 = arith.constant 0 : i32
    %c0_i32_0 = arith.constant 0 : i32
    return %arg0, %c0_i32 : i32, i32
  }
  func.func @transform_1(%arg0: i32) -> (i32, i32) {
    %c0_i32 = arith.constant 0 : i32
    %c0_i32_0 = arith.constant 0 : i32
    %c0_i32_1 = arith.constant 0 : i32
    return %c0_i32, %c0_i32_0 : i32, i32
  }
  func.func @transform_2(%arg0: i32) -> (i32, i32) {
    %c0_i32 = arith.constant 0 : i32
    %c0_i32_0 = arith.constant 0 : i32
    return %arg0, %c0_i32 : i32, i32
  }
  func.func @transform_3(%arg0: i32) -> (i32, i32, i32) {
    %c0_i32 = arith.constant 0 : i32
    %c0_i32_0 = arith.constant 0 : i32
    %c0_i32_1 = arith.constant 0 : i32
    return %arg0, %c0_i32, %c0_i32_0 : i32, i32, i32
  }
  func.func @transform_4(%arg0: i32) -> (i32, i32, i32) {
    %c0_i32 = arith.constant 0 : i32
    %c0_i32_0 = arith.constant 0 : i32
    %c0_i32_1 = arith.constant 0 : i32
    return %arg0, %c0_i32, %c0_i32_0 : i32, i32, i32
  }
}

module attributes {stable_mosaic.version = 11 : i64} {
  func.func @_pass2_kernel(%arg0: i32, %arg1: memref<256x128xf32, #tpu.memory_space<vmem>>, %arg2: memref<1x128xf32, #tpu.memory_space<vmem>>, %arg3: memref<1x128xf32, #tpu.memory_space<vmem>>, %arg4: memref<256x128xf32, #tpu.memory_space<vmem>>) attributes {dimension_semantics = [#tpu.dimension_semantics<parallel>], iteration_bounds = array<i64: 2>, scalar_prefetch = 0 : i64, scratch_operands = 0 : i64, tpu.core_type = #tpu.core_type<tc>, window_params = [{transform_indices = @transform_0, window_bounds = array<i64: 256, 128>}, {pipeline_mode = #tpu.pipeline_mode<synchronous>, transform_indices = @transform_1, window_bounds = array<i64: 1, 128>}, {pipeline_mode = #tpu.pipeline_mode<synchronous>, transform_indices = @transform_2, window_bounds = array<i64: 1, 128>}, {transform_indices = @transform_3, window_bounds = array<i64: 256, 128>}]} {
    %c0 = arith.constant 0 : index
    %c0_0 = arith.constant 0 : index
    %0 = vector.load %arg1[%c0, %c0_0] : memref<256x128xf32, #tpu.memory_space<vmem>>, vector<256x128xf32>
    %c0_1 = arith.constant 0 : index
    %c0_2 = arith.constant 0 : index
    %1 = vector.load %arg2[%c0_1, %c0_2] : memref<1x128xf32, #tpu.memory_space<vmem>>, vector<1x128xf32>
    %2 = vector.broadcast %1 : vector<1x128xf32> to vector<256x128xf32>
    %3 = arith.mulf %0, %2 : vector<256x128xf32>
    %c0_3 = arith.constant 0 : index
    %c0_4 = arith.constant 0 : index
    %4 = vector.load %arg3[%c0_3, %c0_4] : memref<1x128xf32, #tpu.memory_space<vmem>>, vector<1x128xf32>
    %5 = vector.broadcast %4 : vector<1x128xf32> to vector<256x128xf32>
    %6 = arith.addf %3, %5 : vector<256x128xf32>
    %cst = arith.constant 0.000000e+00 : f32
    %7 = vector.broadcast %cst : f32 to vector<256x128xf32>
    %8 = arith.maximumf %6, %7 : vector<256x128xf32>
    %c0_5 = arith.constant 0 : index
    %c0_6 = arith.constant 0 : index
    %9 = vector.load %arg4[%c0_5, %c0_6] : memref<256x128xf32, #tpu.memory_space<vmem>>, vector<256x128xf32>
    tpu.vector_store %arg4[%c0_5, %c0_6], %8 {strides = array<i32>} : memref<256x128xf32, #tpu.memory_space<vmem>>, vector<256x128xf32>,
    return
  }
  func.func @transform_0(%arg0: i32) -> (i32, i32) {
    %c0_i32 = arith.constant 0 : i32
    %c0_i32_0 = arith.constant 0 : i32
    return %arg0, %c0_i32 : i32, i32
  }
  func.func @transform_1(%arg0: i32) -> (i32, i32) {
    %c0_i32 = arith.constant 0 : i32
    %c0_i32_0 = arith.constant 0 : i32
    %c0_i32_1 = arith.constant 0 : i32
    return %c0_i32, %c0_i32_0 : i32, i32
  }
  func.func @transform_2(%arg0: i32) -> (i32, i32) {
    %c0_i32 = arith.constant 0 : i32
    %c0_i32_0 = arith.constant 0 : i32
    %c0_i32_1 = arith.constant 0 : i32
    return %c0_i32, %c0_i32_0 : i32, i32
  }
  func.func @transform_3(%arg0: i32) -> (i32, i32) {
    %c0_i32 = arith.constant 0 : i32
    %c0_i32_0 = arith.constant 0 : i32
    return %arg0, %c0_i32 : i32, i32
  }
}

</mosaic_0001>

<llo_original>
// kernel: base_conv_forward.3
$region0: #{base_conv_forward.3}
  #allocation0 [shape = 'u32[]', space=smem, size = 0x4, offset = 0x4, fixed_abs, tag = 'smem constant byte address 0x4 - core index']
  #allocation1 [shape = 'u32[144,128]{1,0:T(1,128)}', space=vmem, size = 0x12000, scoped, tag = 'internal scratch']
  %s0 = inlined_call_operand.vmem [shape: f32[512,128], index: 0, kind: input, shape index: {}, may-alias: {0,3}]
  %s1 = inlined_call_operand.vmem [shape: f32[1,128], index: 1, kind: input, shape index: {}]
  %s2 = inlined_call_operand.vmem [shape: f32[1,128], index: 2, kind: input, shape index: {}]
  %s3 = inlined_call_operand.vmem [shape: f32[512,128], index: 3, kind: output, shape index: {}, may-alias: {0,3}]
  %s4 = sld [smem:[#allocation0]]
  $region45: #{base_conv_forward.3} parent=0
    _
  %s6 = ssub.s32 1, %s4
  %s7 = scalar_select 0, %s6, %s4
  loop: start=0, step=1, limit=4
  $region2: #{base_conv_forward.3} parent=0 // loop_pre_header
    _
  $region3: #{base_conv_forward.3} parent=0 // loop_header
    %s9 = sphi 0, %s13
    %p10 = scmp.ge.s32.totalorder %s9, 4
    %s19 = sphi 0, %s21
    %s22 = sphi 0, %s19
    %s23 = sphi 0, %s22
    %s39 = sphi 0, %s23
    %s43 = sphi 0, %s43
    %s45 = sphi 0, %s43
    %s46 = sphi 0, %s45
    %s60 = sphi 0, %s46
    %s64 = sphi 0, %s64
    %s66 = sphi 0, %s64
    %s67 = sphi 0, %s66
    %s81 = sphi 0, %s67
    %s87 = sphi 0, %s89
    %s90 = sphi 0, %s87
    %s91 = sphi 0, %s90
    %s107 = sphi 0, %s91
  $region4: #{base_conv_forward.3} parent=0 // loop_header_branch
    %12 = sbr.rel (%p10) target = $region8
  $region5: #{base_conv_forward.3} parent=0 // loop_body
    %s14 = ssub.s32 %s9, 1
    %s15 = ssub.s32 %s9, 2
    %s16 = sadd.s32 %s9, 1
    %s17 = ssub.s32 %s9, %s16
    %p18 = scmp.eq.s32.totalorder %s17, 0
    %s20 = sadd.s32 %s19, 1
    %s21 = scalar_select %p18, %s19, %s20
    %p24 = pneg %p18
    %p25 = scmp.eq.s32.totalorder %s9, 1
    %p26 = por %p24, %p25
    %p27 = scmp.ne.s32.totalorder %s19, %s22
    %p28 = scmp.eq.s32.totalorder %s9, 0
    %p29 = por %p27, %p28
    %p30 = scmp.ne.s32.totalorder %s19, %s22
    %p31 = scmp.eq.s32.totalorder %s14, 1
    %p32 = por %p30, %p31
    %p33 = scmp.ne.s32.totalorder %s22, %s23
    %p34 = scmp.eq.s32.totalorder %s14, 0
    %p35 = por %p33, %p34
    %p36 = scmp.ne.s32.totalorder %s22, %s23
    %p37 = scmp.eq.s32.totalorder %s15, 1
    %p38 = por %p36, %p37
    %p40 = scmp.ne.s32.totalorder %s23, %s39
    %p41 = scmp.eq.s32.totalorder %s15, 0
    %p42 = por %p40, %p41
    %s44 = sadd.s32 %s43, 1
    %p47 = scmp.eq.s32.totalorder %s9, 1
    %p48 = scmp.ne.s32.totalorder %s43, %s45
    %p49 = scmp.eq.s32.totalorder %s9, 0
    %p50 = por %p48, %p49
    %p51 = scmp.ne.s32.totalorder %s43, %s45
    %p52 = scmp.eq.s32.totalorder %s14, 1
    %p53 = por %p51, %p52
    %p54 = scmp.ne.s32.totalorder %s45, %s46
    %p55 = scmp.eq.s32.totalorder %s14, 0
    %p56 = por %p54, %p55
    %p57 = scmp.ne.s32.totalorder %s45, %s46
    %p58 = scmp.eq.s32.totalorder %s15, 1
    %p59 = por %p57, %p58
    %p61 = scmp.ne.s32.totalorder %s46, %s60
    %p62 = scmp.eq.s32.totalorder %s15, 0
    %p63 = por %p61, %p62
    %s65 = sadd.s32 %s64, 1
    %p68 = scmp.eq.s32.totalorder %s9, 1
    %p69 = scmp.ne.s32.totalorder %s64, %s66
    %p70 = scmp.eq.s32.totalorder %s9, 0
    %p71 = por %p69, %p70
    %p72 = scmp.ne.s32.totalorder %s64, %s66
    %p73 = scmp.eq.s32.totalorder %s14, 1
    %p74 = por %p72, %p73
    %p75 = scmp.ne.s32.totalorder %s66, %s67
    %p76 = scmp.eq.s32.totalorder %s14, 0
    %p77 = por %p75, %p76
    %p78 = scmp.ne.s32.totalorder %s66, %s67
    %p79 = scmp.eq.s32.totalorder %s15, 1
    %p80 = por %p78, %p79
    %p82 = scmp.ne.s32.totalorder %s67, %s81
    %p83 = scmp.eq.s32.totalorder %s15, 0
    %p84 = por %p82, %p83
    %s85 = ssub.s32 %s9, %s16
    %p86 = scmp.eq.s32.totalorder %s85, 0
    %s88 = sadd.s32 %s87, 1
    %s89 = scalar_select %p86, %s87, %s88
    %p92 = pneg %p86
    %p93 = scmp.eq.s32.totalorder %s9, 1
    %p94 = por %p92, %p93
    %p95 = scmp.ne.s32.totalorder %s87, %s90
    %p96 = scmp.eq.s32.totalorder %s9, 0
    %p97 = por %p95, %p96
    %p98 = scmp.ne.s32.totalorder %s87, %s90
    %p99 = scmp.eq.s32.totalorder %s14, 1
    %p100 = por %p98, %p99
    %p101 = scmp.ne.s32.totalorder %s90, %s91
    %p102 = scmp.eq.s32.totalorder %s14, 0
    %p103 = por %p101, %p102
    %p104 = scmp.ne.s32.totalorder %s90, %s91
    %p105 = scmp.eq.s32.totalorder %s15, 1
    %p106 = por %p104, %p105
    %p108 = scmp.ne.s32.totalorder %s91, %s107
    %p109 = scmp.eq.s32.totalorder %s15, 0
    %p110 = por %p108, %p109
    %p111 = scmp.le.s32.totalorder 1, %s9
    %p112 = scmp.lt.s32.totalorder %s9, 3
    %p113 = pnand %p111, %p112
    %p114 = pneg %p113
    // Predicated region
    $region9: #{base_conv_forward.3} parent=5 // pred_check
      _
    $region10: #{base_conv_forward.3} parent=5 // pred_check_branch
      %116 = sbr.rel (%p113) target = $region12
    $region11: #{base_conv_forward.3} parent=5 // pred_region
      %s117 = ssub.s32 %s9, 1
      // Predicated region
      $region13: #{base_conv_forward.3} parent=11 // pred_check
        %p118 = pneg %p56
      $region14: #{base_conv_forward.3} parent=11 // pred_check_branch
        %120 = sbr.rel (%p118) target = $region16
      $region15: #{base_conv_forward.3} parent=11 // pred_region
        _
      $region16: #{base_conv_forward.3} parent=11 // pred_fallthru
        _
      // Predicated region
      $region17: #{base_conv_forward.3} parent=11 // pred_check
        %p121 = pneg %p77
      $region18: #{base_conv_forward.3} parent=11 // pred_check_branch
        %123 = sbr.rel (%p121) target = $region20
      $region19: #{base_conv_forward.3} parent=11 // pred_region
        _
      $region20: #{base_conv_forward.3} parent=11 // pred_fallthru
        _
    $region12: #{base_conv_forward.3} parent=5 // pred_fallthru
      _
    %p124 = scmp.lt.s32.totalorder %s9, 2
    // Predicated region
    $region21: #{base_conv_forward.3} parent=5 // pred_check
      %p125 = pneg %p124
    $region22: #{base_conv_forward.3} parent=5 // pred_check_branch
      %127 = sbr.rel (%p125) target = $region24
    $region23: #{base_conv_forward.3} parent=5 // pred_region
      // Predicated region
      $region25: #{base_conv_forward.3} parent=23 // pred_check
        %p128 = pneg %p29
      $region26: #{base_conv_forward.3} parent=23 // pred_check_branch
        %130 = sbr.rel (%p128) target = $region28
      $region27: #{base_conv_forward.3} parent=23 // pred_region
        %s131 = smul.u32 32, %s9
        %p132 = scmp.lt.s32.totalorder %s131, 63
        %s133 = scalar_select %p132, %s131, 63
        %s134 = smul.addr %s133, 8
        %s135 = scalar_lea.vmem %s0, %s134
        %s136 = smul.u32 32, %s9
      $region28: #{base_conv_forward.3} parent=23 // pred_fallthru
        _
    $region24: #{base_conv_forward.3} parent=5 // pred_fallthru
      _
    %p137 = scmp.le.s32.totalorder 1, %s9
    %p138 = scmp.lt.s32.totalorder %s9, 3
    %p139 = pnand %p137, %p138
    %p140 = pneg %p139
    // Predicated region
    $region29: #{base_conv_forward.3} parent=5 // pred_check
      _
    $region30: #{base_conv_forward.3} parent=5 // pred_check_branch
      %142 = sbr.rel (%p139) target = $region32
    $region31: #{base_conv_forward.3} parent=5 // pred_region
      %s143 = ssub.s32 %s9, 1
      %s144 = smul.u32 32, %s14
      %p145 = scmp.lt.s32.totalorder %s144, 63
      %s146 = scalar_select %p145, %s144, 63
      %s147 = smul.addr %s146, 8
      %s148 = scalar_lea.vmem %s0, %s147
      %p149 = pneg %p35
      %p150 = pneg %p32
      %p151 = pneg %p56
      %p152 = pneg %p53
      %p153 = pneg %p77
      %p154 = pneg %p74
      %p155 = pneg %p103
      %p156 = pneg %p100
      %s157 = smul.u32 32, %s14
      %p158 = scmp.lt.s32.totalorder %s157, 63
      %s159 = scalar_select %p158, %s157, 63
      %s160 = smul.addr %s159, 8
      %s161 = scalar_lea.vmem %s3, %s160
      %s162 = smul.u32 32, %s14
      %p163 = scmp.lt.s32.totalorder %s162, 63
      %s164 = scalar_select %p163, %s162, 63
      %s165 = smul.addr %s164, 8
      %s166 = scalar_lea.vmem %s0, %s165
      %s167 = smul.u32 32, %s14
      %s168 = smul.u32 32, %s14
      %p169 = scmp.lt.s32.totalorder %s168, 63
      %s170 = scalar_select %p169, %s168, 63
      %s171 = smul.addr %s170, 8
      %s172 = scalar_lea.vmem %s3, %s171
      %s173 = smul.u32 32, %s14
      %v174 = vld [vmem:[%s166] sm:$0xff]
      %v175 = vld [vmem:[%s166 + $0x8] sm:$0xff]
      %v176 = vld [vmem:[%s166 + $0x10] sm:$0xff]
      %v177 = vld [vmem:[%s166 + $0x18] sm:$0xff]
      %v178 = vld [vmem:[%s166 + $0x20] sm:$0xff]
      %v179 = vld [vmem:[%s166 + $0x28] sm:$0xff]
      %v180 = vld [vmem:[%s166 + $0x30] sm:$0xff]
      %v181 = vld [vmem:[%s166 + $0x38] sm:$0xff]
      %v182 = vld [vmem:[%s166 + $0x40] sm:$0xff]
      %v183 = vld [vmem:[%s166 + $0x48] sm:$0xff]
      %v184 = vld [vmem:[%s166 + $0x50] sm:$0xff]
      %v185 = vld [vmem:[%s166 + $0x58] sm:$0xff]
      %v186 = vld [vmem:[%s166 + $0x60] sm:$0xff]
      %v187 = vld [vmem:[%s166 + $0x68] sm:$0xff]
      %v188 = vld [vmem:[%s166 + $0x70] sm:$0xff]
      %v189 = vld [vmem:[%s166 + $0x78] sm:$0xff]
      %v190 = vld [vmem:[%s166 + $0x80] sm:$0xff]
      %v191 = vld [vmem:[%s166 + $0x88] sm:$0xff]
      %v192 = vld [vmem:[%s166 + $0x90] sm:$0xff]
      %v193 = vld [vmem:[%s166 + $0x98] sm:$0xff]
      %v194 = vld [vmem:[%s166 + $0xa0] sm:$0xff]
      %v195 = vld [vmem:[%s166 + $0xa8] sm:$0xff]
      %v196 = vld [vmem:[%s166 + $0xb0] sm:$0xff]
      %v197 = vld [vmem:[%s166 + $0xb8] sm:$0xff]
      %v198 = vld [vmem:[%s166 + $0xc0] sm:$0xff]
      %v199 = vld [vmem:[%s166 + $0xc8] sm:$0xff]
      %v200 = vld [vmem:[%s166 + $0xd0] sm:$0xff]
      %v201 = vld [vmem:[%s166 + $0xd8] sm:$0xff]
      %v202 = vld [vmem:[%s166 + $0xe0] sm:$0xff]
      %v203 = vld [vmem:[%s166 + $0xe8] sm:$0xff]
      %v204 = vld [vmem:[%s166 + $0xf0] sm:$0xff]
      %v205 = vld [vmem:[%s166 + $0xf8] sm:$0xff]
      %v206 = vld [vmem:[%s1] sm:$0x1]
      %v208 = vlaneseq
      %v209 = vshrl.u32 %v208, 7
      %v210 = vsub.s32 0, %v209
      %v211 = vrot.slane %v206, %v210
      %v213 = vmul.f32 %v174, %v211
      %v214 = vmul.f32 %v175, %v211
      %v215 = vmul.f32 %v176, %v211
      %v216 = vmul.f32 %v177, %v211
      %v217 = vmul.f32 %v178, %v211
      %v218 = vmul.f32 %v179, %v211
      %v219 = vmul.f32 %v180, %v211
      %v220 = vmul.f32 %v181, %v211
      %v221 = vmul.f32 %v182, %v211
      %v222 = vmul.f32 %v183, %v211
      %v223 = vmul.f32 %v184, %v211
      %v224 = vmul.f32 %v185, %v211
      %v225 = vmul.f32 %v186, %v211
      %v226 = vmul.f32 %v187, %v211
      %v227 = vmul.f32 %v188, %v211
      %v228 = vmul.f32 %v189, %v211
      %v229 = vmul.f32 %v190, %v211
      %v230 = vmul.f32 %v191, %v211
      %v231 = vmul.f32 %v192, %v211
      %v232 = vmul.f32 %v193, %v211
      %v233 = vmul.f32 %v194, %v211
      %v234 = vmul.f32 %v195, %v211
      %v235 = vmul.f32 %v196, %v211
      %v236 = vmul.f32 %v197, %v211
      %v237 = vmul.f32 %v198, %v211
      %v238 = vmul.f32 %v199, %v211
      %v239 = vmul.f32 %v200, %v211
      %v240 = vmul.f32 %v201, %v211
      %v241 = vmul.f32 %v202, %v211
      %v242 = vmul.f32 %v203, %v211
      %v243 = vmul.f32 %v204, %v211
      %v244 = vmul.f32 %v205, %v211
      %v245 = vld [vmem:[%s2] sm:$0x1]
      %v247 = vlaneseq
      %v248 = vshrl.u32 %v247, 7
      %v249 = vsub.s32 0, %v248
      %v250 = vrot.slane %v245, %v249
      %v252 = vadd.f32 %v213, %v250
      %v253 = vadd.f32 %v214, %v250
      %v254 = vadd.f32 %v215, %v250
      %v255 = vadd.f32 %v216, %v250
      %v256 = vadd.f32 %v217, %v250
      %v257 = vadd.f32 %v218, %v250
      %v258 = vadd.f32 %v219, %v250
      %v259 = vadd.f32 %v220, %v250
      %v260 = vadd.f32 %v221, %v250
      %v261 = vadd.f32 %v222, %v250
      %v262 = vadd.f32 %v223, %v250
      %v263 = vadd.f32 %v224, %v250
      %v264 = vadd.f32 %v225, %v250
      %v265 = vadd.f32 %v226, %v250
      %v266 = vadd.f32 %v227, %v250
      %v267 = vadd.f32 %v228, %v250
      %v268 = vadd.f32 %v229, %v250
      %v269 = vadd.f32 %v230, %v250
      %v270 = vadd.f32 %v231, %v250
      %v271 = vadd.f32 %v232, %v250
      %v272 = vadd.f32 %v233, %v250
      %v273 = vadd.f32 %v234, %v250
      %v274 = vadd.f32 %v235, %v250
      %v275 = vadd.f32 %v236, %v250
      %v276 = vadd.f32 %v237, %v250
      %v277 = vadd.f32 %v238, %v250
      %v278 = vadd.f32 %v239, %v250
      %v279 = vadd.f32 %v240, %v250
      %v280 = vadd.f32 %v241, %v250
      %v281 = vadd.f32 %v242, %v250
      %v282 = vadd.f32 %v243, %v250
      %v283 = vadd.f32 %v244, %v250
      %v284 = vmax.f32 %v252, 0.0
      %v285 = vmax.f32 %v253, 0.0
      %v286 = vmax.f32 %v254, 0.0
      %v287 = vmax.f32 %v255, 0.0
      %v288 = vmax.f32 %v256, 0.0
      %v289 = vmax.f32 %v257, 0.0
      %v290 = vmax.f32 %v258, 0.0
      %v291 = vmax.f32 %v259, 0.0
      %v292 = vmax.f32 %v260, 0.0
      %v293 = vmax.f32 %v261, 0.0
      %v294 = vmax.f32 %v262, 0.0
      %v295 = vmax.f32 %v263, 0.0
      %v296 = vmax.f32 %v264, 0.0
      %v297 = vmax.f32 %v265, 0.0
      %v298 = vmax.f32 %v266, 0.0
      %v299 = vmax.f32 %v267, 0.0
      %v300 = vmax.f32 %v268, 0.0
      %v301 = vmax.f32 %v269, 0.0
      %v302 = vmax.f32 %v270, 0.0
      %v303 = vmax.f32 %v271, 0.0
      %v304 = vmax.f32 %v272, 0.0
      %v305 = vmax.f32 %v273, 0.0
      %v306 = vmax.f32 %v274, 0.0
      %v307 = vmax.f32 %v275, 0.0
      %v308 = vmax.f32 %v276, 0.0
      %v309 = vmax.f32 %v277, 0.0
      %v310 = vmax.f32 %v278, 0.0
      %v311 = vmax.f32 %v279, 0.0
      %v312 = vmax.f32 %v280, 0.0
      %v313 = vmax.f32 %v281, 0.0
      %v314 = vmax.f32 %v282, 0.0
      %v315 = vmax.f32 %v283, 0.0
      %316 = vst [vmem:[%s172] sm:$0xff] %v284
      %317 = vst [vmem:[%s172 + $0x8] sm:$0xff] %v285
      %318 = vst [vmem:[%s172 + $0x10] sm:$0xff] %v286
      %319 = vst [vmem:[%s172 + $0x18] sm:$0xff] %v287
      %320 = vst [vmem:[%s172 + $0x20] sm:$0xff] %v288
      %321 = vst [vmem:[%s172 + $0x28] sm:$0xff] %v289
      %322 = vst [vmem:[%s172 + $0x30] sm:$0xff] %v290
      %323 = vst [vmem:[%s172 + $0x38] sm:$0xff] %v291
      %324 = vst [vmem:[%s172 + $0x40] sm:$0xff] %v292
      %325 = vst [vmem:[%s172 + $0x48] sm:$0xff] %v293
      %326 = vst [vmem:[%s172 + $0x50] sm:$0xff] %v294
      %327 = vst [vmem:[%s172 + $0x58] sm:$0xff] %v295
      %328 = vst [vmem:[%s172 + $0x60] sm:$0xff] %v296
      %329 = vst [vmem:[%s172 + $0x68] sm:$0xff] %v297
      %330 = vst [vmem:[%s172 + $0x70] sm:$0xff] %v298
      %331 = vst [vmem:[%s172 + $0x78] sm:$0xff] %v299
      %332 = vst [vmem:[%s172 + $0x80] sm:$0xff] %v300
      %333 = vst [vmem:[%s172 + $0x88] sm:$0xff] %v301
      %334 = vst [vmem:[%s172 + $0x90] sm:$0xff] %v302
      %335 = vst [vmem:[%s172 + $0x98] sm:$0xff] %v303
      %336 = vst [vmem:[%s172 + $0xa0] sm:$0xff] %v304
      %337 = vst [vmem:[%s172 + $0xa8] sm:$0xff] %v305
      %338 = vst [vmem:[%s172 + $0xb0] sm:$0xff] %v306
      %339 = vst [vmem:[%s172 + $0xb8] sm:$0xff] %v307
      %340 = vst [vmem:[%s172 + $0xc0] sm:$0xff] %v308
      %341 = vst [vmem:[%s172 + $0xc8] sm:$0xff] %v309
      %342 = vst [vmem:[%s172 + $0xd0] sm:$0xff] %v310
      %343 = vst [vmem:[%s172 + $0xd8] sm:$0xff] %v311
      %344 = vst [vmem:[%s172 + $0xe0] sm:$0xff] %v312
      %345 = vst [vmem:[%s172 + $0xe8] sm:$0xff] %v313
      %346 = vst [vmem:[%s172 + $0xf0] sm:$0xff] %v314
      %347 = vst [vmem:[%s172 + $0xf8] sm:$0xff] %v315
      %s348 = smul.u32 32, %s14
      %p349 = scmp.lt.s32.totalorder %s348, 63
      %s350 = scalar_select %p349, %s348, 63
      %s351 = smul.addr %s350, 8
      %s352 = scalar_lea.vmem %s3, %s351
      // Predicated region
      $region33: #{base_conv_forward.3} parent=31 // pred_check
        %p353 = pneg %p100
      $region34: #{base_conv_forward.3} parent=31 // pred_check_branch
        %355 = sbr.rel (%p353) target = $region36
      $region35: #{base_conv_forward.3} parent=31 // pred_region
        %s356 = smul.u32 32, %s14
      $region36: #{base_conv_forward.3} parent=31 // pred_fallthru
        _
    $region32: #{base_conv_forward.3} parent=5 // pred_fallthru
      _
    %p357 = scmp.le.s32.totalorder 2, %s9
    // Predicated region
    $region37: #{base_conv_forward.3} parent=5 // pred_check
      %p358 = pneg %p357
    $region38: #{base_conv_forward.3} parent=5 // pred_check_branch
      %360 = sbr.rel (%p358) target = $region40
    $region39: #{base_conv_forward.3} parent=5 // pred_region
      %s361 = ssub.s32 %s9, 2
      // Predicated region
      $region41: #{base_conv_forward.3} parent=39 // pred_check
        %p362 = pneg %p106
      $region42: #{base_conv_forward.3} parent=39 // pred_check_branch
        %364 = sbr.rel (%p362) target = $region44
      $region43: #{base_conv_forward.3} parent=39 // pred_region
        %s365 = smul.u32 32, %s15
        %p366 = scmp.lt.s32.totalorder %s365, 63
        %s367 = scalar_select %p366, %s365, 63
        %s368 = smul.addr %s367, 8
        %s369 = scalar_lea.vmem %s3, %s368
      $region44: #{base_conv_forward.3} parent=39 // pred_fallthru
        _
    $region40: #{base_conv_forward.3} parent=5 // pred_fallthru
      _
  $region6: #{base_conv_forward.3} parent=0 // loop_footer
    %s13 = sadd.s32 1, %s9
  $region7: #{base_conv_forward.3} parent=0 // loop_footer_branch
    %8 = sbr.rel target = $region3
  $region8: #{base_conv_forward.3} parent=0 // loop_exit
    _

// kernel: base_conv_forward.2
$region0: #{base_conv_forward.2}
  #allocation0 [shape = 'u32[]', space=smem, size = 0x4, offset = 0x4, fixed_abs, tag = 'smem constant byte address 0x4 - core index']
  #allocation1 [shape = 'u32[144,128]{1,0:T(1,128)}', space=vmem, size = 0x12000, scoped, tag = 'internal scratch']
  %s0 = inlined_call_operand.vmem [shape: f32[512,36], index: 0, kind: input, shape index: {}]
  %s1 = inlined_call_operand.vmem [shape: f32[36,128], index: 1, kind: input, shape index: {}]
  %s2 = inlined_call_operand.vmem [shape: f32[512,128], index: 2, kind: output, shape index: {0}]
  %s3 = inlined_call_operand.vmem [shape: f32[2,1,128], index: 3, kind: output, shape index: {1}]
  %s4 = inlined_call_operand.vmem [shape: f32[2,1,128], index: 4, kind: output, shape index: {2}]
  %5 = xla_tuple %s2, %s3, %s4
  %s6 = sld [smem:[#allocation0]]
  $region57: #{base_conv_forward.2} parent=0
    _
  %s8 = ssub.s32 1, %s6
  %s9 = scalar_select 0, %s8, %s6
  loop: start=0, step=1, limit=4
  $region2: #{base_conv_forward.2} parent=0 // loop_pre_header
    _
  $region3: #{base_conv_forward.2} parent=0 // loop_header
    %s11 = sphi 0, %s15
    %p12 = scmp.ge.s32.totalorder %s11, 4
    %s21 = sphi 0, %s23
    %s24 = sphi 0, %s21
    %s25 = sphi 0, %s24
    %s41 = sphi 0, %s25
    %s45 = sphi 0, %s45
    %s47 = sphi 0, %s45
    %s48 = sphi 0, %s47
    %s62 = sphi 0, %s48
    %s68 = sphi 0, %s70
    %s71 = sphi 0, %s68
    %s72 = sphi 0, %s71
    %s88 = sphi 0, %s72
    %s94 = sphi 0, %s96
    %s97 = sphi 0, %s94
    %s98 = sphi 0, %s97
    %s114 = sphi 0, %s98
    %s120 = sphi 0, %s122
    %s123 = sphi 0, %s120
    %s124 = sphi 0, %s123
    %s140 = sphi 0, %s124
  $region4: #{base_conv_forward.2} parent=0 // loop_header_branch
    %14 = sbr.rel (%p12) target = $region8
  $region5: #{base_conv_forward.2} parent=0 // loop_body
    %s16 = ssub.s32 %s11, 1
    %s17 = ssub.s32 %s11, 2
    %s18 = sadd.s32 %s11, 1
    %s19 = ssub.s32 %s11, %s18
    %p20 = scmp.eq.s32.totalorder %s19, 0
    %s22 = sadd.s32 %s21, 1
    %s23 = scalar_select %p20, %s21, %s22
    %p26 = pneg %p20
    %p27 = scmp.eq.s32.totalorder %s11, 1
    %p28 = por %p26, %p27
    %p29 = scmp.ne.s32.totalorder %s21, %s24
    %p30 = scmp.eq.s32.totalorder %s11, 0
    %p31 = por %p29, %p30
    %p32 = scmp.ne.s32.totalorder %s21, %s24
    %p33 = scmp.eq.s32.totalorder %s16, 1
    %p34 = por %p32, %p33
    %p35 = scmp.ne.s32.totalorder %s24, %s25
    %p36 = scmp.eq.s32.totalorder %s16, 0
    %p37 = por %p35, %p36
    %p38 = scmp.ne.s32.totalorder %s24, %s25
    %p39 = scmp.eq.s32.totalorder %s17, 1
    %p40 = por %p38, %p39
    %p42 = scmp.ne.s32.totalorder %s25, %s41
    %p43 = scmp.eq.s32.totalorder %s17, 0
    %p44 = por %p42, %p43
    %s46 = sadd.s32 %s45, 1
    %p49 = scmp.eq.s32.totalorder %s11, 1
    %p50 = scmp.ne.s32.totalorder %s45, %s47
    %p51 = scmp.eq.s32.totalorder %s11, 0
    %p52 = por %p50, %p51
    %p53 = scmp.ne.s32.totalorder %s45, %s47
    %p54 = scmp.eq.s32.totalorder %s16, 1
    %p55 = por %p53, %p54
    %p56 = scmp.ne.s32.totalorder %s47, %s48
    %p57 = scmp.eq.s32.totalorder %s16, 0
    %p58 = por %p56, %p57
    %p59 = scmp.ne.s32.totalorder %s47, %s48
    %p60 = scmp.eq.s32.totalorder %s17, 1
    %p61 = por %p59, %p60
    %p63 = scmp.ne.s32.totalorder %s48, %s62
    %p64 = scmp.eq.s32.totalorder %s17, 0
    %p65 = por %p63, %p64
    %s66 = ssub.s32 %s11, %s18
    %p67 = scmp.eq.s32.totalorder %s66, 0
    %s69 = sadd.s32 %s68, 1
    %s70 = scalar_select %p67, %s68, %s69
    %p73 = pneg %p67
    %p74 = scmp.eq.s32.totalorder %s11, 1
    %p75 = por %p73, %p74
    %p76 = scmp.ne.s32.totalorder %s68, %s71
    %p77 = scmp.eq.s32.totalorder %s11, 0
    %p78 = por %p76, %p77
    %p79 = scmp.ne.s32.totalorder %s68, %s71
    %p80 = scmp.eq.s32.totalorder %s16, 1
    %p81 = por %p79, %p80
    %p82 = scmp.ne.s32.totalorder %s71, %s72
    %p83 = scmp.eq.s32.totalorder %s16, 0
    %p84 = por %p82, %p83
    %p85 = scmp.ne.s32.totalorder %s71, %s72
    %p86 = scmp.eq.s32.totalorder %s17, 1
    %p87 = por %p85, %p86
    %p89 = scmp.ne.s32.totalorder %s72, %s88
    %p90 = scmp.eq.s32.totalorder %s17, 0
    %p91 = por %p89, %p90
    %s92 = ssub.s32 %s11, %s18
    %p93 = scmp.eq.s32.totalorder %s92, 0
    %s95 = sadd.s32 %s94, 1
    %s96 = scalar_select %p93, %s94, %s95
    %p99 = pneg %p93
    %p100 = scmp.eq.s32.totalorder %s11, 1
    %p101 = por %p99, %p100
    %p102 = scmp.ne.s32.totalorder %s94, %s97
    %p103 = scmp.eq.s32.totalorder %s11, 0
    %p104 = por %p102, %p103
    %p105 = scmp.ne.s32.totalorder %s94, %s97
    %p106 = scmp.eq.s32.totalorder %s16, 1
    %p107 = por %p105, %p106
    %p108 = scmp.ne.s32.totalorder %s97, %s98
    %p109 = scmp.eq.s32.totalorder %s16, 0
    %p110 = por %p108, %p109
    %p111 = scmp.ne.s32.totalorder %s97, %s98
    %p112 = scmp.eq.s32.totalorder %s17, 1
    %p113 = por %p111, %p112
    %p115 = scmp.ne.s32.totalorder %s98, %s114
    %p116 = scmp.eq.s32.totalorder %s17, 0
    %p117 = por %p115, %p116
    %s118 = ssub.s32 %s11, %s18
    %p119 = scmp.eq.s32.totalorder %s118, 0
    %s121 = sadd.s32 %s120, 1
    %s122 = scalar_select %p119, %s120, %s121
    %p125 = pneg %p119
    %p126 = scmp.eq.s32.totalorder %s11, 1
    %p127 = por %p125, %p126
    %p128 = scmp.ne.s32.totalorder %s120, %s123
    %p129 = scmp.eq.s32.totalorder %s11, 0
    %p130 = por %p128, %p129
    %p131 = scmp.ne.s32.totalorder %s120, %s123
    %p132 = scmp.eq.s32.totalorder %s16, 1
    %p133 = por %p131, %p132
    %p134 = scmp.ne.s32.totalorder %s123, %s124
    %p135 = scmp.eq.s32.totalorder %s16, 0
    %p136 = por %p134, %p135
    %p137 = scmp.ne.s32.totalorder %s123, %s124
    %p138 = scmp.eq.s32.totalorder %s17, 1
    %p139 = por %p137, %p138
    %p141 = scmp.ne.s32.totalorder %s124, %s140
    %p142 = scmp.eq.s32.totalorder %s17, 0
    %p143 = por %p141, %p142
    %p144 = scmp.le.s32.totalorder 1, %s11
    %p145 = scmp.lt.s32.totalorder %s11, 3
    %p146 = pnand %p144, %p145
    %p147 = pneg %p146
    // Predicated region
    $region9: #{base_conv_forward.2} parent=5 // pred_check
      _
    $region10: #{base_conv_forward.2} parent=5 // pred_check_branch
      %149 = sbr.rel (%p146) target = $region12
    $region11: #{base_conv_forward.2} parent=5 // pred_region
      %s150 = ssub.s32 %s11, 1
      // Predicated region
      $region13: #{base_conv_forward.2} parent=11 // pred_check
        %p151 = pneg %p58
      $region14: #{base_conv_forward.2} parent=11 // pred_check_branch
        %153 = sbr.rel (%p151) target = $region16
      $region15: #{base_conv_forward.2} parent=11 // pred_region
        _
      $region16: #{base_conv_forward.2} parent=11 // pred_fallthru
        _
    $region12: #{base_conv_forward.2} parent=5 // pred_fallthru
      _
    %p154 = scmp.lt.s32.totalorder %s11, 2
    // Predicated region
    $region17: #{base_conv_forward.2} parent=5 // pred_check
      %p155 = pneg %p154
    $region18: #{base_conv_forward.2} parent=5 // pred_check_branch
      %157 = sbr.rel (%p155) target = $region20
    $region19: #{base_conv_forward.2} parent=5 // pred_region
      // Predicated region
      $region21: #{base_conv_forward.2} parent=19 // pred_check
        %p158 = pneg %p31
      $region22: #{base_conv_forward.2} parent=19 // pred_check_branch
        %160 = sbr.rel (%p158) target = $region24
      $region23: #{base_conv_forward.2} parent=19 // pred_region
        %s161 = smul.u32 32, %s11
        %p162 = scmp.lt.s32.totalorder %s161, 63
        %s163 = scalar_select %p162, %s161, 63
        %s164 = smul.addr %s163, 8
        %s165 = scalar_lea.vmem %s0, %s164
        %s166 = smul.u32 32, %s11
      $region24: #{base_conv_forward.2} parent=19 // pred_fallthru
        _
    $region20: #{base_conv_forward.2} parent=5 // pred_fallthru
      _
    %p167 = scmp.le.s32.totalorder 1, %s11
    %p168 = scmp.lt.s32.totalorder %s11, 3
    %p169 = pnand %p167, %p168
    %p170 = pneg %p169
    // Predicated region
    $region25: #{base_conv_forward.2} parent=5 // pred_check
      _
    $region26: #{base_conv_forward.2} parent=5 // pred_check_branch
      %172 = sbr.rel (%p169) target = $region28
    $region27: #{base_conv_forward.2} parent=5 // pred_region
      %s173 = ssub.s32 %s11, 1
      %s174 = smul.u32 32, %s16
      %p175 = scmp.lt.s32.totalorder %s174, 63
      %s176 = scalar_select %p175, %s174, 63
      %s177 = smul.addr %s176, 8
      %s178 = scalar_lea.vmem %s0, %s177
      %p179 = pneg %p37
      %p180 = pneg %p34
      %p181 = pneg %p58
      %p182 = pneg %p55
      %p183 = pneg %p84
      %p184 = pneg %p81
      %s185 = smul.u32 32, %s16
      %p186 = scmp.lt.s32.totalorder %s185, 63
      %s187 = scalar_select %p186, %s185, 63
      %s188 = smul.addr %s187, 8
      %s189 = scalar_lea.vmem %s2, %s188
      %p190 = pneg %p110
      %p191 = pneg %p107
      %p192 = scmp.lt.s32.totalorder %s16, 1
      %s193 = scalar_select %p192, %s16, 1
      %s194 = scalar_lea.vmem %s3, %s193
      %p195 = pneg %p136
      %p196 = pneg %p133
      %p197 = scmp.lt.s32.totalorder %s16, 1
      %s198 = scalar_select %p197, %s16, 1
      %s199 = scalar_lea.vmem %s4, %s198
      %s200 = smul.u32 32, %s16
      %p201 = scmp.lt.s32.totalorder %s200, 63
      %s202 = scalar_select %p201, %s200, 63
      %s203 = smul.addr %s202, 8
      %s204 = scalar_lea.vmem %s0, %s203
      %s205 = smul.u32 32, %s16
      %s206 = smul.u32 32, %s16
      %p207 = scmp.lt.s32.totalorder %s206, 63
      %s208 = scalar_select %p207, %s206, 63
      %s209 = smul.addr %s208, 8
      %s210 = scalar_lea.vmem %s2, %s209
      %s211 = smul.u32 32, %s16
      %p212 = scmp.lt.s32.totalorder %s16, 1
      %s213 = scalar_select %p212, %s16, 1
      %s214 = scalar_lea.vmem %s3, %s213
      %p215 = scmp.lt.s32.totalorder %s16, 1
      %s216 = scalar_select %p215, %s16, 1
      %s217 = scalar_lea.vmem %s4, %s216
      %v218 = vld [vmem:[%s204] sm:$0xff]
      %v219 = vld [vmem:[%s204 + $0x8] sm:$0xff]
      %v220 = vld [vmem:[%s204 + $0x10] sm:$0xff]
      %v221 = vld [vmem:[%s204 + $0x18] sm:$0xff]
      %v222 = vld [vmem:[%s204 + $0x20] sm:$0xff]
      %v223 = vld [vmem:[%s204 + $0x28] sm:$0xff]
      %v224 = vld [vmem:[%s204 + $0x30] sm:$0xff]
      %v225 = vld [vmem:[%s204 + $0x38] sm:$0xff]
      %v226 = vld [vmem:[%s204 + $0x40] sm:$0xff]
      %v227 = vld [vmem:[%s204 + $0x48] sm:$0xff]
      %v228 = vld [vmem:[%s204 + $0x50] sm:$0xff]
      %v229 = vld [vmem:[%s204 + $0x58] sm:$0xff]
      %v230 = vld [vmem:[%s204 + $0x60] sm:$0xff]
      %v231 = vld [vmem:[%s204 + $0x68] sm:$0xff]
      %v232 = vld [vmem:[%s204 + $0x70] sm:$0xff]
      %v233 = vld [vmem:[%s204 + $0x78] sm:$0xff]
      %v234 = vld [vmem:[%s204 + $0x80] sm:$0xff]
      %v235 = vld [vmem:[%s204 + $0x88] sm:$0xff]
      %v236 = vld [vmem:[%s204 + $0x90] sm:$0xff]
      %v237 = vld [vmem:[%s204 + $0x98] sm:$0xff]
      %v238 = vld [vmem:[%s204 + $0xa0] sm:$0xff]
      %v239 = vld [vmem:[%s204 + $0xa8] sm:$0xff]
      %v240 = vld [vmem:[%s204 + $0xb0] sm:$0xff]
      %v241 = vld [vmem:[%s204 + $0xb8] sm:$0xff]
      %v242 = vld [vmem:[%s204 + $0xc0] sm:$0xff]
      %v243 = vld [vmem:[%s204 + $0xc8] sm:$0xff]
      %v244 = vld [vmem:[%s204 + $0xd0] sm:$0xff]
      %v245 = vld [vmem:[%s204 + $0xd8] sm:$0xff]
      %v246 = vld [vmem:[%s204 + $0xe0] sm:$0xff]
      %v247 = vld [vmem:[%s204 + $0xe8] sm:$0xff]
      %v248 = vld [vmem:[%s204 + $0xf0] sm:$0xff]
      %v249 = vld [vmem:[%s204 + $0xf8] sm:$0xff]
      %v250 = vld [vmem:[%s1] sm:$0xff]
      %v251 = vld [vmem:[%s1 + $0x8] sm:$0xff]
      %v252 = vld [vmem:[%s1 + $0x10] sm:$0xff]
      %v253 = vld [vmem:[%s1 + $0x18] sm:$0xff]
      %v254 = vld [vmem:[%s1 + $0x20] sm:$0xf]
      %vm255 = vcmask 293888
      %v257 = vsel %vm255, %v218, 0
      %v260 = vsel %vm255, %v219, 0
      %v263 = vsel %vm255, %v220, 0
      %v266 = vsel %vm255, %v221, 0
      %v269 = vsel %vm255, %v222, 0
      %v272 = vsel %vm255, %v223, 0
      %v275 = vsel %vm255, %v224, 0
      %v278 = vsel %vm255, %v225, 0
      %v281 = vsel %vm255, %v226, 0
      %v284 = vsel %vm255, %v227, 0
      %v287 = vsel %vm255, %v228, 0
      %v290 = vsel %vm255, %v229, 0
      %v293 = vsel %vm255, %v230, 0
      %v296 = vsel %vm255, %v231, 0
      %v299 = vsel %vm255, %v232, 0
      %v302 = vsel %vm255, %v233, 0
      %v305 = vsel %vm255, %v234, 0
      %v308 = vsel %vm255, %v235, 0
      %v311 = vsel %vm255, %v236, 0
      %v314 = vsel %vm255, %v237, 0
      %v317 = vsel %vm255, %v238, 0
      %v320 = vsel %vm255, %v239, 0
      %v323 = vsel %vm255, %v240, 0
      %v326 = vsel %vm255, %v241, 0
      %v329 = vsel %vm255, %v242, 0
      %v332 = vsel %vm255, %v243, 0
      %v335 = vsel %vm255, %v244, 0
      %v338 = vsel %vm255, %v245, 0
      %v341 = vsel %vm255, %v246, 0
      %v344 = vsel %vm255, %v247, 0
      %v347 = vsel %vm255, %v248, 0
      %v350 = vsel %vm255, %v249, 0
      %vm352 = vcmask 1043456
      %v354 = vsel %vm352, %v254, 0
      %356 = vmatprep.subr.mxu0 0.0
      %357 = vmatpush1.msra.mxu0 %v250
      %358 = vmatprep.subr.mxu0 0.0
      %359 = vmatpush1.msra.mxu0 %v251
      %360 = vmatprep.subr.mxu0 0.0
      %361 = vmatpush1.msra.mxu0 %v252
      %362 = vmatprep.subr.mxu0 0.0
      %363 = vmatpush1.msra.mxu0 %v253
      %364 = vmatprep.subr.mxu0 0.0
      %365 = vmatpush1.msra.mxu0 %v354
      %366 = vmatprep.subr.mxu0 0.0
      %367 = vmatpush1.msra.mxu0 0.0
      %368 = vmatprep.subr.mxu0 0.0
      %369 = vmatpush1.msra.mxu0 0.0
      %370 = vmatprep.subr.mxu0 0.0
      %371 = vmatpush1.msra.mxu0 0.0
      %372 = vmatprep.subr.mxu0 0.0
      %373 = vmatpush1.msra.mxu0 0.0
      %374 = vmatprep.subr.mxu0 0.0
      %375 = vmatpush1.msra.mxu0 0.0
      %376 = vmatprep.subr.mxu0 0.0
      %377 = vmatpush1.msra.mxu0 0.0
      %378 = vmatprep.subr.mxu0 0.0
      %379 = vmatpush1.msra.mxu0 0.0
      %380 = vmatprep.subr.mxu0 0.0
      %381 = vmatpush1.msra.mxu0 0.0
      %382 = vmatprep.subr.mxu0 0.0
      %383 = vmatpush1.msra.mxu0 0.0
      %384 = vmatprep.subr.mxu0 0.0
      %385 = vmatpush1.msra.mxu0 0.0
      %386 = vmatprep.subr.mxu0 0.0
      %387 = vmatpush1.msra.mxu0 0.0
      %388 = vmatprep.subr.mxu0 0.0
      %389 = vmatpush1.msra.mxu0 0.0
      %390 = vmatprep.subr.mxu0 0.0
      %391 = vmatpush1.msra.mxu0 0.0
      %392 = vmatprep.subr.mxu0 0.0
      %393 = vmatpush1.msra.mxu0 0.0
      %394 = vmatprep.subr.mxu0 0.0
      %395 = vmatpush1.msra.mxu0 0.0
      %396 = vmatprep.subr.mxu0 0.0
      %397 = vmatpush1.msra.mxu0 0.0
      %398 = vmatprep.subr.mxu0 0.0
      %399 = vmatpush1.msra.mxu0 0.0
      %400 = vmatprep.subr.mxu0 0.0
      %401 = vmatpush1.msra.mxu0 0.0
      %402 = vmatprep.subr.mxu0 0.0
      %403 = vmatpush1.msra.mxu0 0.0
      %404 = vmatprep.subr.mxu0 0.0
      %405 = vmatpush1.msra.mxu0 0.0
      %406 = vmatprep.subr.mxu0 0.0
      %407 = vmatpush1.msra.mxu0 0.0
      %408 = vmatprep.subr.mxu0 0.0
      %409 = vmatpush1.msra.mxu0 0.0
      %410 = vmatprep.subr.mxu0 0.0
      %411 = vmatpush1.msra.mxu0 0.0
      %412 = vmatprep.subr.mxu0 0.0
      %413 = vmatpush1.msra.mxu0 0.0
      %414 = vmatprep.subr.mxu0 0.0
      %415 = vmatpush1.msra.mxu0 0.0
      %416 = vmatprep.subr.mxu0 0.0
      %417 = vmatpush1.msra.mxu0 0.0
      %418 = vmatprep.subr.mxu0 0.0
      %419 = vmatpush1.msra.mxu0 0.0
      %420 = vmatprep.mubr.f32.mxu0 0.0
      %421 = vmatmul.mubr.f32.gmra.mrb[0].mxu0 %v257
      %v422 = vpop.f32.mrb[0].mxu0
      %v423 = vadd.f32 0.0, %v422
      %v424 = vpop.f32.mrb[0].mxu0
      %425 = vmatprep.mubr.f32.mxu0 0.0
      %426 = vmatmul.mubr.f32.gmra.mrb[0].mxu0 %v260
      %v427 = vpop.f32.mrb[0].mxu0
      %v428 = vadd.f32 0.0, %v427
      %v429 = vpop.f32.mrb[0].mxu0
      %430 = vmatprep.mubr.f32.mxu0 0.0
      %431 = vmatmul.mubr.f32.gmra.mrb[0].mxu0 %v263
      %v432 = vpop.f32.mrb[0].mxu0
      %v433 = vadd.f32 0.0, %v432
      %v434 = vpop.f32.mrb[0].mxu0
      %435 = vmatprep.mubr.f32.mxu0 0.0
      %436 = vmatmul.mubr.f32.gmra.mrb[0].mxu0 %v266
      %v437 = vpop.f32.mrb[0].mxu0
      %v438 = vadd.f32 0.0, %v437
      %v439 = vpop.f32.mrb[0].mxu0
      %440 = vmatprep.mubr.f32.mxu0 0.0
      %441 = vmatmul.mubr.f32.gmra.mrb[0].mxu0 %v269
      %v442 = vpop.f32.mrb[0].mxu0
      %v443 = vadd.f32 0.0, %v442
      %v444 = vpop.f32.mrb[0].mxu0
      %445 = vmatprep.mubr.f32.mxu0 0.0
      %446 = vmatmul.mubr.f32.gmra.mrb[0].mxu0 %v272
      %v447 = vpop.f32.mrb[0].mxu0
      %v448 = vadd.f32 0.0, %v447
      %v449 = vpop.f32.mrb[0].mxu0
      %450 = vmatprep.mubr.f32.mxu0 0.0
      %451 = vmatmul.mubr.f32.gmra.mrb[0].mxu0 %v275
      %v452 = vpop.f32.mrb[0].mxu0
      %v453 = vadd.f32 0.0, %v452
      %v454 = vpop.f32.mrb[0].mxu0
      %455 = vmatprep.mubr.f32.mxu0 0.0
      %456 = vmatmul.mubr.f32.gmra.mrb[0].mxu0 %v278
      %v457 = vpop.f32.mrb[0].mxu0
      %v458 = vadd.f32 0.0, %v457
      %v459 = vpop.f32.mrb[0].mxu0
      %460 = vmatprep.mubr.f32.mxu0 0.0
      %461 = vmatmul.mubr.f32.gmra.mrb[0].mxu0 %v281
      %v462 = vpop.f32.mrb[0].mxu0
      %v463 = vadd.f32 0.0, %v462
      %v464 = vpop.f32.mrb[0].mxu0
      %465 = vmatprep.mubr.f32.mxu0 0.0
      %466 = vmatmul.mubr.f32.gmra.mrb[0].mxu0 %v284
      %v467 = vpop.f32.mrb[0].mxu0
      %v468 = vadd.f32 0.0, %v467
      %v469 = vpop.f32.mrb[0].mxu0
      %470 = vmatprep.mubr.f32.mxu0 0.0
      %471 = vmatmul.mubr.f32.gmra.mrb[0].mxu0 %v287
      %v472 = vpop.f32.mrb[0].mxu0
      %v473 = vadd.f32 0.0, %v472
      %v474 = vpop.f32.mrb[0].mxu0
      %475 = vmatprep.mubr.f32.mxu0 0.0
      %476 = vmatmul.mubr.f32.gmra.mrb[0].mxu0 %v290
      %v477 = vpop.f32.mrb[0].mxu0
      %v478 = vadd.f32 0.0, %v477
      %v479 = vpop.f32.mrb[0].mxu0
      %480 = vmatprep.mubr.f32.mxu0 0.0
      %481 = vmatmul.mubr.f32.gmra.mrb[0].mxu0 %v293
      %v482 = vpop.f32.mrb[0].mxu0
      %v483 = vadd.f32 0.0, %v482
      %v484 = vpop.f32.mrb[0].mxu0
      %485 = vmatprep.mubr.f32.mxu0 0.0
      %486 = vmatmul.mubr.f32.gmra.mrb[0].mxu0 %v296
      %v487 = vpop.f32.mrb[0].mxu0
      %v488 = vadd.f32 0.0, %v487
      %v489 = vpop.f32.mrb[0].mxu0
      %490 = vmatprep.mubr.f32.mxu0 0.0
      %491 = vmatmul.mubr.f32.gmra.mrb[0].mxu0 %v299
      %v492 = vpop.f32.mrb[0].mxu0
      %v493 = vadd.f32 0.0, %v492
      %v494 = vpop.f32.mrb[0].mxu0
      %495 = vmatprep.mubr.f32.mxu0 0.0
      %496 = vmatmul.mubr.f32.gmra.mrb[0].mxu0 %v302
      %v497 = vpop.f32.mrb[0].mxu0
      %v498 = vadd.f32 0.0, %v497
      %v499 = vpop.f32.mrb[0].mxu0
      %500 = vmatprep.mubr.f32.mxu0 0.0
      %501 = vmatmul.mubr.f32.gmra.mrb[0].mxu0 %v305
      %v502 = vpop.f32.mrb[0].mxu0
      %v503 = vadd.f32 0.0, %v502
      %v504 = vpop.f32.mrb[0].mxu0
      %505 = vmatprep.mubr.f32.mxu0 0.0
      %506 = vmatmul.mubr.f32.gmra.mrb[0].mxu0 %v308
      %v507 = vpop.f32.mrb[0].mxu0
      %v508 = vadd.f32 0.0, %v507
      %v509 = vpop.f32.mrb[0].mxu0
      %510 = vmatprep.mubr.f32.mxu0 0.0
      %511 = vmatmul.mubr.f32.gmra.mrb[0].mxu0 %v311
      %v512 = vpop.f32.mrb[0].mxu0
      %v513 = vadd.f32 0.0, %v512
      %v514 = vpop.f32.mrb[0].mxu0
      %515 = vmatprep.mubr.f32.mxu0 0.0
      %516 = vmatmul.mubr.f32.gmra.mrb[0].mxu0 %v314
      %v517 = vpop.f32.mrb[0].mxu0
      %v518 = vadd.f32 0.0, %v517
      %v519 = vpop.f32.mrb[0].mxu0
      %520 = vmatprep.mubr.f32.mxu0 0.0
      %521 = vmatmul.mubr.f32.gmra.mrb[0].mxu0 %v317
      %v522 = vpop.f32.mrb[0].mxu0
      %v523 = vadd.f32 0.0, %v522
      %v524 = vpop.f32.mrb[0].mxu0
      %525 = vmatprep.mubr.f32.mxu0 0.0
      %526 = vmatmul.mubr.f32.gmra.mrb[0].mxu0 %v320
      %v527 = vpop.f32.mrb[0].mxu0
      %v528 = vadd.f32 0.0, %v527
      %v529 = vpop.f32.mrb[0].mxu0
      %530 = vmatprep.mubr.f32.mxu0 0.0
      %531 = vmatmul.mubr.f32.gmra.mrb[0].mxu0 %v323
      %v532 = vpop.f32.mrb[0].mxu0
      %v533 = vadd.f32 0.0, %v532
      %v534 = vpop.f32.mrb[0].mxu0
      %535 = vmatprep.mubr.f32.mxu0 0.0
      %536 = vmatmul.mubr.f32.gmra.mrb[0].mxu0 %v326
      %v537 = vpop.f32.mrb[0].mxu0
      %v538 = vadd.f32 0.0, %v537
      %v539 = vpop.f32.mrb[0].mxu0
      %540 = vmatprep.mubr.f32.mxu0 0.0
      %541 = vmatmul.mubr.f32.gmra.mrb[0].mxu0 %v329
      %v542 = vpop.f32.mrb[0].mxu0
      %v543 = vadd.f32 0.0, %v542
      %v544 = vpop.f32.mrb[0].mxu0
      %545 = vmatprep.mubr.f32.mxu0 0.0
      %546 = vmatmul.mubr.f32.gmra.mrb[0].mxu0 %v332
      %v547 = vpop.f32.mrb[0].mxu0
      %v548 = vadd.f32 0.0, %v547
      %v549 = vpop.f32.mrb[0].mxu0
      %550 = vmatprep.mubr.f32.mxu0 0.0
      %551 = vmatmul.mubr.f32.gmra.mrb[0].mxu0 %v335
      %v552 = vpop.f32.mrb[0].mxu0
      %v553 = vadd.f32 0.0, %v552
      %v554 = vpop.f32.mrb[0].mxu0
      %555 = vmatprep.mubr.f32.mxu0 0.0
      %556 = vmatmul.mubr.f32.gmra.mrb[0].mxu0 %v338
      %v557 = vpop.f32.mrb[0].mxu0
      %v558 = vadd.f32 0.0, %v557
      %v559 = vpop.f32.mrb[0].mxu0
      %560 = vmatprep.mubr.f32.mxu0 0.0
      %561 = vmatmul.mubr.f32.gmra.mrb[0].mxu0 %v341
      %v562 = vpop.f32.mrb[0].mxu0
      %v563 = vadd.f32 0.0, %v562
      %v564 = vpop.f32.mrb[0].mxu0
      %565 = vmatprep.mubr.f32.mxu0 0.0
      %566 = vmatmul.mubr.f32.gmra.mrb[0].mxu0 %v344
      %v567 = vpop.f32.mrb[0].mxu0
      %v568 = vadd.f32 0.0, %v567
      %v569 = vpop.f32.mrb[0].mxu0
      %570 = vmatprep.mubr.f32.mxu0 0.0
      %571 = vmatmul.mubr.f32.gmra.mrb[0].mxu0 %v347
      %v572 = vpop.f32.mrb[0].mxu0
      %v573 = vadd.f32 0.0, %v572
      %v574 = vpop.f32.mrb[0].mxu0
      %575 = vmatprep.mubr.f32.mxu0 0.0
      %576 = vmatmul.mubr.f32.gmra.mrb[0].mxu0 %v350
      %v577 = vpop.f32.mrb[0].mxu0
      %v578 = vadd.f32 0.0, %v577
      %v579 = vpop.f32.mrb[0].mxu0
      %580 = vdwg.mxu0
      %581 = vst [vmem:[%s210] sm:$0xff] %v423
      %582 = vst [vmem:[%s210 + $0x8] sm:$0xff] %v428
      %583 = vst [vmem:[%s210 + $0x10] sm:$0xff] %v433
      %584 = vst [vmem:[%s210 + $0x18] sm:$0xff] %v438
      %585 = vst [vmem:[%s210 + $0x20] sm:$0xff] %v443
      %586 = vst [vmem:[%s210 + $0x28] sm:$0xff] %v448
      %587 = vst [vmem:[%s210 + $0x30] sm:$0xff] %v453
      %588 = vst [vmem:[%s210 + $0x38] sm:$0xff] %v458
      %589 = vst [vmem:[%s210 + $0x40] sm:$0xff] %v463
      %590 = vst [vmem:[%s210 + $0x48] sm:$0xff] %v468
      %591 = vst [vmem:[%s210 + $0x50] sm:$0xff] %v473
      %592 = vst [vmem:[%s210 + $0x58] sm:$0xff] %v478
      %593 = vst [vmem:[%s210 + $0x60] sm:$0xff] %v483
      %594 = vst [vmem:[%s210 + $0x68] sm:$0xff] %v488
      %595 = vst [vmem:[%s210 + $0x70] sm:$0xff] %v493
      %596 = vst [vmem:[%s210 + $0x78] sm:$0xff] %v498
      %597 = vst [vmem:[%s210 + $0x80] sm:$0xff] %v503
      %598 = vst [vmem:[%s210 + $0x88] sm:$0xff] %v508
      %599 = vst [vmem:[%s210 + $0x90] sm:$0xff] %v513
      %600 = vst [vmem:[%s210 + $0x98] sm:$0xff] %v518
      %601 = vst [vmem:[%s210 + $0xa0] sm:$0xff] %v523
      %602 = vst [vmem:[%s210 + $0xa8] sm:$0xff] %v528
      %603 = vst [vmem:[%s210 + $0xb0] sm:$0xff] %v533
      %604 = vst [vmem:[%s210 + $0xb8] sm:$0xff] %v538
      %605 = vst [vmem:[%s210 + $0xc0] sm:$0xff] %v543
      %606 = vst [vmem:[%s210 + $0xc8] sm:$0xff] %v548
      %607 = vst [vmem:[%s210 + $0xd0] sm:$0xff] %v553
      %608 = vst [vmem:[%s210 + $0xd8] sm:$0xff] %v558
      %609 = vst [vmem:[%s210 + $0xe0] sm:$0xff] %v563
      %610 = vst [vmem:[%s210 + $0xe8] sm:$0xff] %v568
      %611 = vst [vmem:[%s210 + $0xf0] sm:$0xff] %v573
      %612 = vst [vmem:[%s210 + $0xf8] sm:$0xff] %v578
      %s613 = smul.u32 %s16, 256
      %s614 = ssub.s32 512, %s613
      %p615 = scmp.lt.s32.totalorder %s614, 256
      %s616 = scalar_select %p615, %s614, 256
      %s617 = scvt.s32.f32 %s616
      %v618 = vlaneseq
      %v619 = vshrl.u32 %v618, 7
      %v620 = vadd.s32 %v619, 8
      %v621 = vadd.s32 %v619, 16
      %v622 = vadd.s32 %v619, 24
      %v623 = vadd.s32 %v619, 32
      %v624 = vadd.s32 %v619, 40
      %v625 = vadd.s32 %v619, 48
      %v626 = vadd.s32 %v619, 56
      %v627 = vadd.s32 %v619, 64
      %v628 = vadd.s32 %v619, 72
      %v629 = vadd.s32 %v619, 80
      %v630 = vadd.s32 %v619, 88
      %v631 = vadd.s32 %v619, 96
      %v632 = vadd.s32 %v619, 104
      %v633 = vadd.s32 %v619, 112
      %v634 = vadd.s32 %v619, 120
      %v635 = vadd.s32 %v619, 128
      %v636 = vadd.s32 %v619, 136
      %v637 = vadd.s32 %v619, 144
      %v638 = vadd.s32 %v619, 152
      %v639 = vadd.s32 %v619, 160
      %v640 = vadd.s32 %v619, 168
      %v641 = vadd.s32 %v619, 176
      %v642 = vadd.s32 %v619, 184
      %v643 = vadd.s32 %v619, 192
      %v644 = vadd.s32 %v619, 200
      %v645 = vadd.s32 %v619, 208
      %v646 = vadd.s32 %v619, 216
      %v647 = vadd.s32 %v619, 224
      %v648 = vadd.s32 %v619, 232
      %v649 = vadd.s32 %v619, 240
      %v650 = vadd.s32 %v619, 248
      %v651 = vstv %s613
      %v652 = vadd.s32 %v651, %v619
      %v653 = vadd.s32 %v651, %v620
      %v654 = vadd.s32 %v651, %v621
      %v655 = vadd.s32 %v651, %v622
      %v656 = vadd.s32 %v651, %v623
      %v657 = vadd.s32 %v651, %v624
      %v658 = vadd.s32 %v651, %v625
      %v659 = vadd.s32 %v651, %v626
      %v660 = vadd.s32 %v651, %v627
      %v661 = vadd.s32 %v651, %v628
      %v662 = vadd.s32 %v651, %v629
      %v663 = vadd.s32 %v651, %v630
      %v664 = vadd.s32 %v651, %v631
      %v665 = vadd.s32 %v651, %v632
      %v666 = vadd.s32 %v651, %v633
      %v667 = vadd.s32 %v651, %v634
      %v668 = vadd.s32 %v651, %v635
      %v669 = vadd.s32 %v651, %v636
      %v670 = vadd.s32 %v651, %v637
      %v671 = vadd.s32 %v651, %v638
      %v672 = vadd.s32 %v651, %v639
      %v673 = vadd.s32 %v651, %v640
      %v674 = vadd.s32 %v651, %v641
      %v675 = vadd.s32 %v651, %v642
      %v676 = vadd.s32 %v651, %v643
      %v677 = vadd.s32 %v651, %v644
      %v678 = vadd.s32 %v651, %v645
      %v679 = vadd.s32 %v651, %v646
      %v680 = vadd.s32 %v651, %v647
      %v681 = vadd.s32 %v651, %v648
      %v682 = vadd.s32 %v651, %v649
      %v683 = vadd.s32 %v651, %v650
      %vm684 = vcmp.lt.s32.totalorder %v652, 512
      %vm685 = vcmp.lt.s32.totalorder %v653, 512
      %vm686 = vcmp.lt.s32.totalorder %v654, 512
      %vm687 = vcmp.lt.s32.totalorder %v655, 512
      %vm688 = vcmp.lt.s32.totalorder %v656, 512
      %vm689 = vcmp.lt.s32.totalorder %v657, 512
      %vm690 = vcmp.lt.s32.totalorder %v658, 512
      %vm691 = vcmp.lt.s32.totalorder %v659, 512
      %vm692 = vcmp.lt.s32.totalorder %v660, 512
      %vm693 = vcmp.lt.s32.totalorder %v661, 512
      %vm694 = vcmp.lt.s32.totalorder %v662, 512
      %vm695 = vcmp.lt.s32.totalorder %v663, 512
      %vm696 = vcmp.lt.s32.totalorder %v664, 512
      %vm697 = vcmp.lt.s32.totalorder %v665, 512
      %vm698 = vcmp.lt.s32.totalorder %v666, 512
      %vm699 = vcmp.lt.s32.totalorder %v667, 512
      %vm700 = vcmp.lt.s32.totalorder %v668, 512
      %vm701 = vcmp.lt.s32.totalorder %v669, 512
      %vm702 = vcmp.lt.s32.totalorder %v670, 512
      %vm703 = vcmp.lt.s32.totalorder %v671, 512
      %vm704 = vcmp.lt.s32.totalorder %v672, 512
      %vm705 = vcmp.lt.s32.totalorder %v673, 512
      %vm706 = vcmp.lt.s32.totalorder %v674, 512
      %vm707 = vcmp.lt.s32.totalorder %v675, 512
      %vm708 = vcmp.lt.s32.totalorder %v676, 512
      %vm709 = vcmp.lt.s32.totalorder %v677, 512
      %vm710 = vcmp.lt.s32.totalorder %v678, 512
      %vm711 = vcmp.lt.s32.totalorder %v679, 512
      %vm712 = vcmp.lt.s32.totalorder %v680, 512
      %vm713 = vcmp.lt.s32.totalorder %v681, 512
      %vm714 = vcmp.lt.s32.totalorder %v682, 512
      %vm715 = vcmp.lt.s32.totalorder %v683, 512
      %v716 = vsel %vm684, 1, 0
      %v717 = vsel %vm685, 1, 0
      %v718 = vsel %vm686, 1, 0
      %v719 = vsel %vm687, 1, 0
      %v720 = vsel %vm688, 1, 0
      %v721 = vsel %vm689, 1, 0
      %v722 = vsel %vm690, 1, 0
      %v723 = vsel %vm691, 1, 0
      %v724 = vsel %vm692, 1, 0
      %v725 = vsel %vm693, 1, 0
      %v726 = vsel %vm694, 1, 0
      %v727 = vsel %vm695, 1, 0
      %v728 = vsel %vm696, 1, 0
      %v729 = vsel %vm697, 1, 0
      %v730 = vsel %vm698, 1, 0
      %v731 = vsel %vm699, 1, 0
      %v732 = vsel %vm700, 1, 0
      %v733 = vsel %vm701, 1, 0
      %v734 = vsel %vm702, 1, 0
      %v735 = vsel %vm703, 1, 0
      %v736 = vsel %vm704, 1, 0
      %v737 = vsel %vm705, 1, 0
      %v738 = vsel %vm706, 1, 0
      %v739 = vsel %vm707, 1, 0
      %v740 = vsel %vm708, 1, 0
      %v741 = vsel %vm709, 1, 0
      %v742 = vsel %vm710, 1, 0
      %v743 = vsel %vm711, 1, 0
      %v744 = vsel %vm712, 1, 0
      %v745 = vsel %vm713, 1, 0
      %v746 = vsel %vm714, 1, 0
      %v747 = vsel %vm715, 1, 0
      %v748 = vcvt.s32.f32 %v716
      %v749 = vcvt.s32.f32 %v717
      %v750 = vcvt.s32.f32 %v718
      %v751 = vcvt.s32.f32 %v719
      %v752 = vcvt.s32.f32 %v720
      %v753 = vcvt.s32.f32 %v721
      %v754 = vcvt.s32.f32 %v722
      %v755 = vcvt.s32.f32 %v723
      %v756 = vcvt.s32.f32 %v724
      %v757 = vcvt.s32.f32 %v725
      %v758 = vcvt.s32.f32 %v726
      %v759 = vcvt.s32.f32 %v727
      %v760 = vcvt.s32.f32 %v728
      %v761 = vcvt.s32.f32 %v729
      %v762 = vcvt.s32.f32 %v730
      %v763 = vcvt.s32.f32 %v731
      %v764 = vcvt.s32.f32 %v732
      %v765 = vcvt.s32.f32 %v733
      %v766 = vcvt.s32.f32 %v734
      %v767 = vcvt.s32.f32 %v735
      %v768 = vcvt.s32.f32 %v736
      %v769 = vcvt.s32.f32 %v737
      %v770 = vcvt.s32.f32 %v738
      %v771 = vcvt.s32.f32 %v739
      %v772 = vcvt.s32.f32 %v740
      %v773 = vcvt.s32.f32 %v741
      %v774 = vcvt.s32.f32 %v742
      %v775 = vcvt.s32.f32 %v743
      %v776 = vcvt.s32.f32 %v744
      %v777 = vcvt.s32.f32 %v745
      %v778 = vcvt.s32.f32 %v746
      %v779 = vcvt.s32.f32 %v747
      %v780 = vadd.f32 %v423, %v428
      %v781 = vadd.f32 %v780, %v433
      %v782 = vadd.f32 %v781, %v438
      %v783 = vadd.f32 %v782, %v443
      %v784 = vadd.f32 %v783, %v448
      %v785 = vadd.f32 %v784, %v453
      %v786 = vadd.f32 %v785, %v458
      %v787 = vadd.f32 %v786, %v463
      %v788 = vadd.f32 %v787, %v468
      %v789 = vadd.f32 %v788, %v473
      %v790 = vadd.f32 %v789, %v478
      %v791 = vadd.f32 %v790, %v483
      %v792 = vadd.f32 %v791, %v488
      %v793 = vadd.f32 %v792, %v493
      %v794 = vadd.f32 %v793, %v498
      %v795 = vadd.f32 %v794, %v503
      %v796 = vadd.f32 %v795, %v508
      %v797 = vadd.f32 %v796, %v513
      %v798 = vadd.f32 %v797, %v518
      %v799 = vadd.f32 %v798, %v523
      %v800 = vadd.f32 %v799, %v528
      %v801 = vadd.f32 %v800, %v533
      %v802 = vadd.f32 %v801, %v538
      %v803 = vadd.f32 %v802, %v543
      %v804 = vadd.f32 %v803, %v548
      %v805 = vadd.f32 %v804, %v553
      %v806 = vadd.f32 %v805, %v558
      %v807 = vadd.f32 %v806, %v563
      %v808 = vadd.f32 %v807, %v568
      %v809 = vadd.f32 %v808, %v573
      %v810 = vadd.f32 %v809, %v578
      %v811 = vrot.slane %v810, 4
      %v812 = vadd.f32 %v810, %v811
      %v813 = vrot.slane %v812, 2
      %v814 = vadd.f32 %v812, %v813
      %v815 = vrot.slane %v814, 1
      %v816 = vadd.f32 %v814, %v815
      %v817 = vstv %s617
      %v818 = vrcp.pop %v817
      %s819 = vtos %v818
      %v820 = vstv %s819
      %v821 = vmul.f32 %v816, %v820
      %v822 = vsub.f32 %v423, %v821
      %v823 = vsub.f32 %v428, %v821
      %v824 = vsub.f32 %v433, %v821
      %v825 = vsub.f32 %v438, %v821
      %v826 = vsub.f32 %v443, %v821
      %v827 = vsub.f32 %v448, %v821
      %v828 = vsub.f32 %v453, %v821
      %v829 = vsub.f32 %v458, %v821
      %v830 = vsub.f32 %v463, %v821
      %v831 = vsub.f32 %v468, %v821
      %v832 = vsub.f32 %v473, %v821
      %v833 = vsub.f32 %v478, %v821
      %v834 = vsub.f32 %v483, %v821
      %v835 = vsub.f32 %v488, %v821
      %v836 = vsub.f32 %v493, %v821
      %v837 = vsub.f32 %v498, %v821
      %v838 = vsub.f32 %v503, %v821
      %v839 = vsub.f32 %v508, %v821
      %v840 = vsub.f32 %v513, %v821
      %v841 = vsub.f32 %v518, %v821
      %v842 = vsub.f32 %v523, %v821
      %v843 = vsub.f32 %v528, %v821
      %v844 = vsub.f32 %v533, %v821
      %v845 = vsub.f32 %v538, %v821
      %v846 = vsub.f32 %v543, %v821
      %v847 = vsub.f32 %v548, %v821
      %v848 = vsub.f32 %v553, %v821
      %v849 = vsub.f32 %v558, %v821
      %v850 = vsub.f32 %v563, %v821
      %v851 = vsub.f32 %v568, %v821
      %v852 = vsub.f32 %v573, %v821
      %v853 = vsub.f32 %v578, %v821
      %v854 = vmul.f32 %v822, %v748
      %v855 = vmul.f32 %v823, %v749
      %v856 = vmul.f32 %v824, %v750
      %v857 = vmul.f32 %v825, %v751
      %v858 = vmul.f32 %v826, %v752
      %v859 = vmul.f32 %v827, %v753
      %v860 = vmul.f32 %v828, %v754
      %v861 = vmul.f32 %v829, %v755
      %v862 = vmul.f32 %v830, %v756
      %v863 = vmul.f32 %v831, %v757
      %v864 = vmul.f32 %v832, %v758
      %v865 = vmul.f32 %v833, %v759
      %v866 = vmul.f32 %v834, %v760
      %v867 = vmul.f32 %v835, %v761
      %v868 = vmul.f32 %v836, %v762
      %v869 = vmul.f32 %v837, %v763
      %v870 = vmul.f32 %v838, %v764
      %v871 = vmul.f32 %v839, %v765
      %v872 = vmul.f32 %v840, %v766
      %v873 = vmul.f32 %v841, %v767
      %v874 = vmul.f32 %v842, %v768
      %v875 = vmul.f32 %v843, %v769
      %v876 = vmul.f32 %v844, %v770
      %v877 = vmul.f32 %v845, %v771
      %v878 = vmul.f32 %v846, %v772
      %v879 = vmul.f32 %v847, %v773
      %v880 = vmul.f32 %v848, %v774
      %v881 = vmul.f32 %v849, %v775
      %v882 = vmul.f32 %v850, %v776
      %v883 = vmul.f32 %v851, %v777
      %v884 = vmul.f32 %v852, %v778
      %v885 = vmul.f32 %v853, %v779
      %v886 = vmul.f32 %v854, %v854
      %v887 = vmul.f32 %v855, %v855
      %v888 = vmul.f32 %v856, %v856
      %v889 = vmul.f32 %v857, %v857
      %v890 = vmul.f32 %v858, %v858
      %v891 = vmul.f32 %v859, %v859
      %v892 = vmul.f32 %v860, %v860
      %v893 = vmul.f32 %v861, %v861
      %v894 = vmul.f32 %v862, %v862
      %v895 = vmul.f32 %v863, %v863
      %v896 = vmul.f32 %v864, %v864
      %v897 = vmul.f32 %v865, %v865
      %v898 = vmul.f32 %v866, %v866
      %v899 = vmul.f32 %v867, %v867
      %v900 = vmul.f32 %v868, %v868
      %v901 = vmul.f32 %v869, %v869
      %v902 = vmul.f32 %v870, %v870
      %v903 = vmul.f32 %v871, %v871
      %v904 = vmul.f32 %v872, %v872
      %v905 = vmul.f32 %v873, %v873
      %v906 = vmul.f32 %v874, %v874
      %v907 = vmul.f32 %v875, %v875
      %v908 = vmul.f32 %v876, %v876
      %v909 = vmul.f32 %v877, %v877
      %v910 = vmul.f32 %v878, %v878
      %v911 = vmul.f32 %v879, %v879
      %v912 = vmul.f32 %v880, %v880
      %v913 = vmul.f32 %v881, %v881
      %v914 = vmul.f32 %v882, %v882
      %v915 = vmul.f32 %v883, %v883
      %v916 = vmul.f32 %v884, %v884
      %v917 = vmul.f32 %v885, %v885
      %v918 = vadd.f32 %v886, %v887
      %v919 = vadd.f32 %v918, %v888
      %v920 = vadd.f32 %v919, %v889
      %v921 = vadd.f32 %v920, %v890
      %v922 = vadd.f32 %v921, %v891
      %v923 = vadd.f32 %v922, %v892
      %v924 = vadd.f32 %v923, %v893
      %v925 = vadd.f32 %v924, %v894
      %v926 = vadd.f32 %v925, %v895
      %v927 = vadd.f32 %v926, %v896
      %v928 = vadd.f32 %v927, %v897
      %v929 = vadd.f32 %v928, %v898
      %v930 = vadd.f32 %v929, %v899
      %v931 = vadd.f32 %v930, %v900
      %v932 = vadd.f32 %v931, %v901
      %v933 = vadd.f32 %v932, %v902
      %v934 = vadd.f32 %v933, %v903
      %v935 = vadd.f32 %v934, %v904
      %v936 = vadd.f32 %v935, %v905
      %v937 = vadd.f32 %v936, %v906
      %v938 = vadd.f32 %v937, %v907
      %v939 = vadd.f32 %v938, %v908
      %v940 = vadd.f32 %v939, %v909
      %v941 = vadd.f32 %v940, %v910
      %v942 = vadd.f32 %v941, %v911
      %v943 = vadd.f32 %v942, %v912
      %v944 = vadd.f32 %v943, %v913
      %v945 = vadd.f32 %v944, %v914
      %v946 = vadd.f32 %v945, %v915
      %v947 = vadd.f32 %v946, %v916
      %v948 = vadd.f32 %v947, %v917
      %v949 = vrot.slane %v948, 4
      %v950 = vadd.f32 %v948, %v949
      %v951 = vrot.slane %v950, 2
      %v952 = vadd.f32 %v950, %v951
      %v953 = vrot.slane %v952, 1
      %v954 = vadd.f32 %v952, %v953
      %955 = vst [vmem:[%s214] sm:$0x1] %v821
      %956 = vst [vmem:[%s217] sm:$0x1] %v954
      %s957 = smul.u32 32, %s16
      %p958 = scmp.lt.s32.totalorder %s957, 63
      %s959 = scalar_select %p958, %s957, 63
      %s960 = smul.addr %s959, 8
      %s961 = scalar_lea.vmem %s2, %s960
      %p962 = scmp.lt.s32.totalorder %s16, 1
      %s963 = scalar_select %p962, %s16, 1
      %s964 = scalar_lea.vmem %s3, %s963
      %p965 = scmp.lt.s32.totalorder %s16, 1
      %s966 = scalar_select %p965, %s16, 1
      %s967 = scalar_lea.vmem %s4, %s966
      // Predicated region
      $region29: #{base_conv_forward.2} parent=27 // pred_check
        %p968 = pneg %p81
      $region30: #{base_conv_forward.2} parent=27 // pred_check_branch
        %970 = sbr.rel (%p968) target = $region32
      $region31: #{base_conv_forward.2} parent=27 // pred_region
        %s971 = smul.u32 32, %s16
      $region32: #{base_conv_forward.2} parent=27 // pred_fallthru
        _
      // Predicated region
      $region33: #{base_conv_forward.2} parent=27 // pred_check
        %p972 = pneg %p107
      $region34: #{base_conv_forward.2} parent=27 // pred_check_branch
        %974 = sbr.rel (%p972) target = $region36
      $region35: #{base_conv_forward.2} parent=27 // pred_region
        _
      $region36: #{base_conv_forward.2} parent=27 // pred_fallthru
        _
      // Predicated region
      $region37: #{base_conv_forward.2} parent=27 // pred_check
        %p975 = pneg %p133
      $region38: #{base_conv_forward.2} parent=27 // pred_check_branch
        %977 = sbr.rel (%p975) target = $region40
      $region39: #{base_conv_forward.2} parent=27 // pred_region
        _
      $region40: #{base_conv_forward.2} parent=27 // pred_fallthru
        _
    $region28: #{base_conv_forward.2} parent=5 // pred_fallthru
      _
    %p978 = scmp.le.s32.totalorder 2, %s11
    // Predicated region
    $region41: #{base_conv_forward.2} parent=5 // pred_check
      %p979 = pneg %p978
    $region42: #{base_conv_forward.2} parent=5 // pred_check_branch
      %981 = sbr.rel (%p979) target = $region44
    $region43: #{base_conv_forward.2} parent=5 // pred_region
      %s982 = ssub.s32 %s11, 2
      // Predicated region
      $region45: #{base_conv_forward.2} parent=43 // pred_check
        %p983 = pneg %p87
      $region46: #{base_conv_forward.2} parent=43 // pred_check_branch
        %985 = sbr.rel (%p983) target = $region48
      $region47: #{base_conv_forward.2} parent=43 // pred_region
        %s986 = smul.u32 32, %s17
        %p987 = scmp.lt.s32.totalorder %s986, 63
        %s988 = scalar_select %p987, %s986, 63
        %s989 = smul.addr %s988, 8
        %s990 = scalar_lea.vmem %s2, %s989
      $region48: #{base_conv_forward.2} parent=43 // pred_fallthru
        _
      // Predicated region
      $region49: #{base_conv_forward.2} parent=43 // pred_check
        %p991 = pneg %p113
      $region50: #{base_conv_forward.2} parent=43 // pred_check_branch
        %993 = sbr.rel (%p991) target = $region52
      $region51: #{base_conv_forward.2} parent=43 // pred_region
        %p994 = scmp.lt.s32.totalorder %s17, 1
        %s995 = scalar_select %p994, %s17, 1
        %s996 = scalar_lea.vmem %s3, %s995
      $region52: #{base_conv_forward.2} parent=43 // pred_fallthru
        _
      // Predicated region
      $region53: #{base_conv_forward.2} parent=43 // pred_check
        %p997 = pneg %p139
      $region54: #{base_conv_forward.2} parent=43 // pred_check_branch
        %999 = sbr.rel (%p997) target = $region56
      $region55: #{base_conv_forward.2} parent=43 // pred_region
        %p1000 = scmp.lt.s32.totalorder %s17, 1
        %s1001 = scalar_select %p1000, %s17, 1
        %s1002 = scalar_lea.vmem %s4, %s1001
      $region56: #{base_conv_forward.2} parent=43 // pred_fallthru
        _
    $region44: #{base_conv_forward.2} parent=5 // pred_fallthru
      _
  $region6: #{base_conv_forward.2} parent=0 // loop_footer
    %s15 = sadd.s32 1, %s11
  $region7: #{base_conv_forward.2} parent=0 // loop_footer_branch
    %10 = sbr.rel target = $region3
  $region8: #{base_conv_forward.2} parent=0 // loop_exit
    _

</llo_original>
